<compile_context>
chip_gen: v7x
topology: tpu7x:2x2x1
jax: 0.10.0
libtpu: 0.0.40
codegen_flags: <defaults>
</compile_context>

<pallas_src>
import jax
import jax.numpy as jnp
from jax.experimental import pallas as pl
from jax.experimental.pallas import tpu as pltpu


def graphsage_kernel(self_ref, adj_ref, feats_ref, w_enc_t_ref, w_cls_t_ref,
                     out_ref, neigh_acc):
    """One (batch-tile, N-tile) grid step of the SupervisedGraphSage forward.

    self_ref    : (TB, F)      bf16  self features of the batch tile
    adj_ref     : (TB, TN)     bf16  row-normalized adjacency slice (mean aggregator)
    feats_ref   : (TN, F)      bf16  slice of the global feature table
    w_enc_t_ref : (2F, E)      bf16  encoder weight, pre-transposed
    w_cls_t_ref : (E, C_pad)   bf16  classifier weight, pre-transposed + zero-padded
    out_ref     : (TB, C_pad)  f32   scores.t() (padded classes)
    neigh_acc   : (TB, F)      f32   VMEM scratch accumulating the neighbor mean
    """
    k = pl.program_id(1)

    @pl.when(k == 0)
    def _init():
        neigh_acc[...] = jnp.zeros_like(neigh_acc)

    # Partial mean aggregation over this N tile: (TB, TN) @ (TN, F), f32 accumulate.
    neigh_acc[...] += jnp.dot(adj_ref[...], feats_ref[...],
                              preferred_element_type=jnp.float32)

    @pl.when(k == pl.num_programs(1) - 1)
    def _finalize():
        # Fused encoder: relu([self, neigh] @ W_enc.T)   -- single K=2F matmul.
        combined = jnp.concatenate(
            [self_ref[...], neigh_acc[...].astype(jnp.bfloat16)], axis=1)
        h = jnp.dot(combined, w_enc_t_ref[...],
                    preferred_element_type=jnp.float32)
        h = jnp.maximum(h, 0.0)                                  # (TB, E)
        # Classifier: embeds @ W_cls.T  (lane-dense padded C).
        out_ref[...] = jnp.dot(h.astype(jnp.bfloat16), w_cls_t_ref[...],
                               preferred_element_type=jnp.float32)


def supervised_graphsage_forward(self_feats, adj_norm, feats_all, w_enc, w_cls,
                                 tb=None, tn=None):
    """Wrapper: casts/pre-transposes weights, pads classes, tiles batch and N."""
    B, F = self_feats.shape
    N = feats_all.shape[0]
    E = w_enc.shape[0]
    C = w_cls.shape[0]
    assert w_enc.shape[1] == 2 * F and adj_norm.shape == (B, N)

    # Lane-dense classifier width.
    C_pad = max(128, pl.cdiv(C, 128) * 128)

    # Tile sizes (sublane multiple of 8, lane-friendly N tiles).
    if tb is None:
        tb = min(B, 128)
    if tn is None:
        tn = N if N <= 512 else 512
    assert B % tb == 0 and N % tn == 0

    # Host glue (done once): bf16 cast + weight pre-transpose + class padding.
    self_bf = self_feats.astype(jnp.bfloat16)
    adj_bf = adj_norm.astype(jnp.bfloat16)
    feats_bf = feats_all.astype(jnp.bfloat16)
    w_enc_t = jnp.transpose(w_enc).astype(jnp.bfloat16)                  # (2F, E)
    w_cls_pad = jnp.zeros((C_pad, E), w_cls.dtype).at[:C].set(w_cls)
    w_cls_t = jnp.transpose(w_cls_pad).astype(jnp.bfloat16)              # (E, C_pad)

    grid = (B // tb, N // tn)
    flops = 2 * B * (N * F + 2 * F * E + E * C_pad)
    bytes_accessed = 2 * (self_bf.size + adj_bf.size + feats_bf.size
                          + w_enc_t.size + w_cls_t.size) + 4 * B * C_pad

    out = pl.pallas_call(
        graphsage_kernel,
        out_shape=jax.ShapeDtypeStruct((B, C_pad), jnp.float32),
        grid_spec=pltpu.PrefetchScalarGridSpec(
            num_scalar_prefetch=0,
            grid=grid,
            in_specs=[
                pl.BlockSpec((tb, F), lambda i, k: (i, 0)),        # self feats
                pl.BlockSpec((tb, tn), lambda i, k: (i, k)),       # adjacency rows
                pl.BlockSpec((tn, F), lambda i, k: (k, 0)),        # feature table tile
                pl.BlockSpec((2 * F, E), lambda i, k: (0, 0)),     # W_enc.T (resident)
                pl.BlockSpec((E, C_pad), lambda i, k: (0, 0)),     # W_cls.T (resident)
            ],
            out_specs=pl.BlockSpec((tb, C_pad), lambda i, k: (i, 0)),
            scratch_shapes=[pltpu.VMEM((tb, F), jnp.float32)],
        ),
        compiler_params=pltpu.CompilerParams(
            dimension_semantics=("parallel", "arbitrary"),
            vmem_limit_bytes=48 * 1024 * 1024,   # budgeted for v7x's 64 MiB VMEM
        ),
        cost_estimate=pl.CostEstimate(
            flops=flops, transcendentals=0, bytes_accessed=bytes_accessed),
    )(self_bf, adj_bf, feats_bf, w_enc_t, w_cls_t)

    # Slice the padded classes back off (padded rows of W_cls are zero).
    return out[:, :C]


def xavier_uniform(key, shape):
    fan_out, fan_in = shape
    bound = (6.0 / (fan_in + fan_out)) ** 0.5
    return jax.random.uniform(key, shape, jnp.float32, -bound, bound)


if __name__ == "__main__":
    # Small, deterministic problem that still exercises both grid axes.
    N_TOTAL = 256      # total nodes in the graph
    FEAT = 32          # raw feature dim
    EMBED = 64         # enc.embed_dim
    NUM_CLASSES = 7
    BATCH = 16         # len(nodes)
    TB, TN = 8, 128    # -> grid (2, 2)

    key = jax.random.PRNGKey(0)
    k_feat, k_adj, k_wenc, k_wcls, k_nodes = jax.random.split(key, 5)

    # Node feature table.
    feats_all = jax.random.normal(k_feat, (N_TOTAL, FEAT), jnp.float32)

    # Random adjacency -> row-normalized mean-aggregation matrix (glue, not hot path).
    adj_raw = (jax.random.uniform(k_adj, (N_TOTAL, N_TOTAL)) < 0.25).astype(jnp.float32)
    adj_raw = adj_raw + jnp.eye(N_TOTAL, dtype=jnp.float32)  # ensure no empty rows
    adj_full = adj_raw / jnp.sum(adj_raw, axis=1, keepdims=True)

    # Batch of node ids (the `nodes` argument).
    nodes = jax.random.randint(k_nodes, (BATCH,), 0, N_TOTAL)

    # Parameters (deterministic Xavier-uniform, matching init.xavier_uniform).
    w_enc = xavier_uniform(k_wenc, (EMBED, 2 * FEAT))        # Encoder.weight
    w_cls = xavier_uniform(k_wcls, (NUM_CLASSES, EMBED))     # SupervisedGraphSage.weight

    # Glue: gather batch rows (self features and their aggregation rows).
    # TODO(synk): the gather could be fused into the kernel via scalar-prefetched
    # node ids + pl.Element row indexing; kept on host for simplicity here.
    self_feats = feats_all[nodes]      # (B, F)
    adj_norm = adj_full[nodes]         # (B, N_TOTAL)

    scores_t = supervised_graphsage_forward(
        self_feats, adj_norm, feats_all, w_enc, w_cls, tb=TB, tn=TN)
    scores_t = jax.block_until_ready(scores_t)

    # Pure-f32 reference of the same math (column-per-node like PyTorch).
    neigh_ref = adj_norm @ feats_all
    combined = jnp.concatenate([self_feats, neigh_ref], axis=1)     # (B, 2F)
    embeds = jnp.maximum(w_enc @ combined.T, 0.0)                   # (E, B)
    ref = (w_cls @ embeds).T                                        # (B, C)

    assert scores_t.shape == (BATCH, NUM_CLASSES)
    # bf16 MXU operands with f32 accumulation -> loosened tolerance vs f32 reference.
    assert jnp.allclose(scores_t, ref, atol=5e-2, rtol=5e-2)
    # TODO(synk): nn.CrossEntropyLoss (the .loss() method) is training-only glue and
    # is not part of the forward pass implemented here.
    print("KERNEL_OK")
</pallas_src>

<mosaic_0001>
module attributes {stable_mosaic.version = 11 : i64} {
  func.func @graphsage_kernel(%arg0: i32, %arg1: i32, %arg2: memref<8x32xbf16, #tpu.memory_space<vmem>>, %arg3: memref<8x128xbf16, #tpu.memory_space<vmem>>, %arg4: memref<128x32xbf16, #tpu.memory_space<vmem>>, %arg5: memref<64x64xbf16, #tpu.memory_space<vmem>>, %arg6: memref<64x128xbf16, #tpu.memory_space<vmem>>, %arg7: memref<8x128xf32, #tpu.memory_space<vmem>>, %arg8: memref<8x32xf32, #tpu.memory_space<vmem>>) attributes {dimension_semantics = [#tpu.dimension_semantics<parallel>, #tpu.dimension_semantics<arbitrary>], iteration_bounds = array<i64: 2, 2>, scalar_prefetch = 0 : i64, scratch_operands = 1 : i64, tpu.core_type = #tpu.core_type<tc>, window_params = [{transform_indices = @transform_0, window_bounds = array<i64: 8, 32>}, {transform_indices = @transform_1, window_bounds = array<i64: 8, 128>}, {transform_indices = @transform_2, window_bounds = array<i64: 128, 32>}, {pipeline_mode = #tpu.pipeline_mode<synchronous>, transform_indices = @transform_3, window_bounds = array<i64: 64, 64>}, {pipeline_mode = #tpu.pipeline_mode<synchronous>, transform_indices = @transform_4, window_bounds = array<i64: 64, 128>}, {transform_indices = @transform_5, window_bounds = array<i64: 8, 128>}]} {
    %c0_i32 = arith.constant 0 : i32
    %0 = arith.cmpi eq, %arg1, %c0_i32 : i32
    %1 = arith.extui %0 : i1 to i32
    %c0_i32_0 = arith.constant 0 : i32
    %2 = arith.cmpi ne, %1, %c0_i32_0 : i32
    scf.if %2 {
      %cst_9 = arith.constant 0.000000e+00 : f32
      %12 = vector.broadcast %cst_9 : f32 to vector<8x32xf32>
      %c0_10 = arith.constant 0 : index
      %c0_11 = arith.constant 0 : index
      %13 = vector.load %arg8[%c0_10, %c0_11] : memref<8x32xf32, #tpu.memory_space<vmem>>, vector<8x32xf32>
      tpu.vector_store %arg8[%c0_10, %c0_11], %12 {strides = array<i32>} : memref<8x32xf32, #tpu.memory_space<vmem>>, vector<8x32xf32>,
    } else {
    }
    %c0 = arith.constant 0 : index
    %c0_1 = arith.constant 0 : index
    %3 = vector.load %arg8[%c0, %c0_1] : memref<8x32xf32, #tpu.memory_space<vmem>>, vector<8x32xf32>
    %c0_2 = arith.constant 0 : index
    %c0_3 = arith.constant 0 : index
    %4 = vector.load %arg3[%c0_2, %c0_3] : memref<8x128xbf16, #tpu.memory_space<vmem>>, vector<8x128xbf16>
    %c0_4 = arith.constant 0 : index
    %c0_5 = arith.constant 0 : index
    %5 = vector.load %arg4[%c0_4, %c0_5] : memref<128x32xbf16, #tpu.memory_space<vmem>>, vector<128x32xbf16>
    %cst = arith.constant dense<0.000000e+00> : vector<8x32xf32>
    %6 = tpu.matmul %4, %5, %cst {dimension_numbers = #tpu.dot_dimension_numbers<[1], [0], [0], [1], [0, 0, 1, 1], [], []>} : vector<8x128xbf16>, vector<128x32xbf16>, vector<8x32xf32> -> vector<8x32xf32>
    %7 = arith.addf %3, %6 : vector<8x32xf32>
    %c0_6 = arith.constant 0 : index
    %c0_7 = arith.constant 0 : index
    %8 = vector.load %arg8[%c0_6, %c0_7] : memref<8x32xf32, #tpu.memory_space<vmem>>, vector<8x32xf32>
    tpu.vector_store %arg8[%c0_6, %c0_7], %7 {strides = array<i32>} : memref<8x32xf32, #tpu.memory_space<vmem>>, vector<8x32xf32>,
    %c1_i32 = arith.constant 1 : i32
    %9 = arith.cmpi eq, %arg1, %c1_i32 : i32
    %10 = arith.extui %9 : i1 to i32
    %c0_i32_8 = arith.constant 0 : i32
    %11 = arith.cmpi ne, %10, %c0_i32_8 : i32
    scf.if %11 {
      %c0_9 = arith.constant 0 : index
      %c0_10 = arith.constant 0 : index
      %12 = vector.load %arg2[%c0_9, %c0_10] : memref<8x32xbf16, #tpu.memory_space<vmem>>, vector<8x32xbf16>
      %c0_11 = arith.constant 0 : index
      %c0_12 = arith.constant 0 : index
      %13 = vector.load %arg8[%c0_11, %c0_12] : memref<8x32xf32, #tpu.memory_space<vmem>>, vector<8x32xf32>
      %14 = arith.truncf %13 : vector<8x32xf32> to vector<8x32xbf16>
      %15 = tpu.concatenate %12, %14 in 1 : vector<8x32xbf16>, vector<8x32xbf16> -> vector<8x64xbf16>
      %c0_13 = arith.constant 0 : index
      %c0_14 = arith.constant 0 : index
      %16 = vector.load %arg5[%c0_13, %c0_14] : memref<64x64xbf16, #tpu.memory_space<vmem>>, vector<64x64xbf16>
      %cst_15 = arith.constant dense<0.000000e+00> : vector<8x64xf32>
      %17 = tpu.matmul %15, %16, %cst_15 {dimension_numbers = #tpu.dot_dimension_numbers<[1], [0], [0], [1], [0, 0, 1, 1], [], []>} : vector<8x64xbf16>, vector<64x64xbf16>, vector<8x64xf32> -> vector<8x64xf32>
      %cst_16 = arith.constant 0.000000e+00 : f32
      %18 = vector.broadcast %cst_16 : f32 to vector<8x64xf32>
      %19 = arith.maximumf %17, %18 : vector<8x64xf32>
      %20 = arith.truncf %19 : vector<8x64xf32> to vector<8x64xbf16>
      %c0_17 = arith.constant 0 : index
      %c0_18 = arith.constant 0 : index
      %21 = vector.load %arg6[%c0_17, %c0_18] : memref<64x128xbf16, #tpu.memory_space<vmem>>, vector<64x128xbf16>
      %cst_19 = arith.constant dense<0.000000e+00> : vector<8x128xf32>
      %22 = tpu.matmul %20, %21, %cst_19 {dimension_numbers = #tpu.dot_dimension_numbers<[1], [0], [0], [1], [0, 0, 1, 1], [], []>} : vector<8x64xbf16>, vector<64x128xbf16>, vector<8x128xf32> -> vector<8x128xf32>
      %c0_20 = arith.constant 0 : index
      %c0_21 = arith.constant 0 : index
      %23 = vector.load %arg7[%c0_20, %c0_21] : memref<8x128xf32, #tpu.memory_space<vmem>>, vector<8x128xf32>
      tpu.vector_store %arg7[%c0_20, %c0_21], %22 {strides = array<i32>} : memref<8x128xf32, #tpu.memory_space<vmem>>, vector<8x128xf32>,
    } else {
    }
    return
  }
  func.func @transform_0(%arg0: i32, %arg1: i32) -> (i32, i32) {
    %c0_i32 = arith.constant 0 : i32
    %c0_i32_0 = arith.constant 0 : i32
    return %arg0, %c0_i32 : i32, i32
  }
  func.func @transform_1(%arg0: i32, %arg1: i32) -> (i32, i32) {
    %c0_i32 = arith.constant 0 : i32
    return %arg0, %arg1 : i32, i32
  }
  func.func @transform_2(%arg0: i32, %arg1: i32) -> (i32, i32) {
    %c0_i32 = arith.constant 0 : i32
    %c0_i32_0 = arith.constant 0 : i32
    return %arg1, %c0_i32 : i32, i32
  }
  func.func @transform_3(%arg0: i32, %arg1: i32) -> (i32, i32) {
    %c0_i32 = arith.constant 0 : i32
    %c0_i32_0 = arith.constant 0 : i32
    %c0_i32_1 = arith.constant 0 : i32
    return %c0_i32, %c0_i32_0 : i32, i32
  }
  func.func @transform_4(%arg0: i32, %arg1: i32) -> (i32, i32) {
    %c0_i32 = arith.constant 0 : i32
    %c0_i32_0 = arith.constant 0 : i32
    %c0_i32_1 = arith.constant 0 : i32
    return %c0_i32, %c0_i32_0 : i32, i32
  }
  func.func @transform_5(%arg0: i32, %arg1: i32) -> (i32, i32) {
    %c0_i32 = arith.constant 0 : i32
    %c0_i32_0 = arith.constant 0 : i32
    return %arg0, %c0_i32 : i32, i32
  }
}

</mosaic_0001>

<llo_original>
// kernel: tpu_custom_call.1
$region0: #{tpu_custom_call.1}
  #allocation0 [shape = 'u32[]', space=smem, size = 0x4, offset = 0x4, fixed_abs, tag = 'smem constant byte address 0x4 - core index']
  #allocation1 [shape = 'u32[144,128]{1,0:T(1,128)}', space=vmem, size = 0x12000, scoped, tag = 'internal scratch']
  #allocation2 [shape = 'f32[8,32]{1,0:T(8,128)}', space=vmem, size = 0x1000, scoped, tag = 'scratch operand']
  %s0 = inlined_call_operand.vmem [shape: bf16[16,32], index: 0, kind: input, shape index: {}]
  %s1 = inlined_call_operand.vmem [shape: bf16[16,256], index: 1, kind: input, shape index: {}]
  %s2 = inlined_call_operand.vmem [shape: bf16[256,32], index: 2, kind: input, shape index: {}]
  %s3 = inlined_call_operand.vmem [shape: bf16[64,64], index: 3, kind: input, shape index: {}]
  %s4 = inlined_call_operand.vmem [shape: bf16[64,128], index: 4, kind: input, shape index: {}]
  %s5 = inlined_call_operand.hbm [shape: f32[16,128], index: 5, kind: output, shape index: {}]
  %s6 = sld [smem:[#allocation0]]
  $region61: #{tpu_custom_call.1} parent=0
    _
  %s8 = ssub.s32 1, %s6
  %s9 = scalar_select 0, %s8, %s6
  $region1: #{tpu_custom_call.1} parent=0
    #allocation3 [shape = 'u8[8192]{0}', space=vmem, size = 0x2000, scoped, tag = 'output window, operand 0']
    #allocation4 [shape = 's32[2]{0}', space=sflag, size = 0x8, scoped, tag = 'scoped memory for tpu_custom_call.1']
    %10 = vsyncpa [#allocation4], 0
    %s11 = scalar_lea.sflag [#allocation4], 1
    %12 = vsyncpa %s11, 0
    loop: start=0, step=1, limit=6
    $region2: #{tpu_custom_call.1} parent=1 // loop_pre_header
      _
    $region3: #{tpu_custom_call.1} parent=1 // loop_header
      %s14 = sphi 0, %s18
      %p15 = scmp.ge.s32.totalorder %s14, 6
      %s21 = sphi 0, %s33
      %s22 = sphi 0, %s29
      %s23 = sphi 0, %s21
      %s24 = sphi 0, %s22
      %s25 = sphi 0, %s23
      %s26 = sphi 0, %s24
      %s36 = sphi 0, %s38
      %s39 = sphi 0, %s36
      %s40 = sphi 0, %s39
      %s56 = sphi 0, %s40
      %s64 = sphi 0, %s66
      %s67 = sphi 0, %s64
      %s68 = sphi 0, %s67
      %s84 = sphi 0, %s68
      %s90 = sphi 0, %s92
      %s93 = sphi 0, %s90
      %s94 = sphi 0, %s93
      %s110 = sphi 0, %s94
      %s114 = sphi 0, %s114
      %s116 = sphi 0, %s114
      %s117 = sphi 0, %s116
      %s131 = sphi 0, %s117
      %s135 = sphi 0, %s135
      %s137 = sphi 0, %s135
      %s138 = sphi 0, %s137
      %s152 = sphi 0, %s138
      %s158 = sphi 0, %s160
      %s161 = sphi 0, %s158
      %s162 = sphi 0, %s161
      %s178 = sphi 0, %s162
    $region4: #{tpu_custom_call.1} parent=1 // loop_header_branch
      %17 = sbr.rel (%p15) target = $region8
    $region5: #{tpu_custom_call.1} parent=1 // loop_body
      %s19 = ssub.s32 %s14, 1
      %s20 = ssub.s32 %s14, 2
      %s27 = sadd.s32 1, %s22
      %p28 = scmp.ge.s32.totalorder %s27, 2
      %s29 = scalar_select %p28, 0, %s27
      %s30 = sadd.s32 1, %s21
      %s31 = scalar_select %p28, %s30, %s21
      %p32 = scmp.ge.s32.totalorder %s31, 2
      %s33 = scalar_select %p32, 0, %s31
      %s34 = ssub.s32 %s21, %s33
      %p35 = scmp.eq.s32.totalorder %s34, 0
      %s37 = sadd.s32 %s36, 1
      %s38 = scalar_select %p35, %s36, %s37
      %p41 = pneg %p35
      %p42 = scmp.eq.s32.totalorder %s14, 3
      %p43 = por %p41, %p42
      %p44 = scmp.ne.s32.totalorder %s36, %s39
      %p45 = scmp.eq.s32.totalorder %s14, 0
      %p46 = por %p44, %p45
      %p47 = scmp.ne.s32.totalorder %s36, %s39
      %p48 = scmp.eq.s32.totalorder %s19, 3
      %p49 = por %p47, %p48
      %p50 = scmp.ne.s32.totalorder %s39, %s40
      %p51 = scmp.eq.s32.totalorder %s19, 0
      %p52 = por %p50, %p51
      %p53 = scmp.ne.s32.totalorder %s39, %s40
      %p54 = scmp.eq.s32.totalorder %s20, 3
      %p55 = por %p53, %p54
      %p57 = scmp.ne.s32.totalorder %s40, %s56
      %p58 = scmp.eq.s32.totalorder %s20, 0
      %p59 = por %p57, %p58
      %s60 = ssub.s32 %s21, %s33
      %s61 = ssub.s32 %s22, %s29
      %s62 = sor.u32 %s60, %s61
      %p63 = scmp.eq.s32.totalorder %s62, 0
      %s65 = sadd.s32 %s64, 1
      %s66 = scalar_select %p63, %s64, %s65
      %p69 = pneg %p63
      %p70 = scmp.eq.s32.totalorder %s14, 3
      %p71 = por %p69, %p70
      %p72 = scmp.ne.s32.totalorder %s64, %s67
      %p73 = scmp.eq.s32.totalorder %s14, 0
      %p74 = por %p72, %p73
      %p75 = scmp.ne.s32.totalorder %s64, %s67
      %p76 = scmp.eq.s32.totalorder %s19, 3
      %p77 = por %p75, %p76
      %p78 = scmp.ne.s32.totalorder %s67, %s68
      %p79 = scmp.eq.s32.totalorder %s19, 0
      %p80 = por %p78, %p79
      %p81 = scmp.ne.s32.totalorder %s67, %s68
      %p82 = scmp.eq.s32.totalorder %s20, 3
      %p83 = por %p81, %p82
      %p85 = scmp.ne.s32.totalorder %s68, %s84
      %p86 = scmp.eq.s32.totalorder %s20, 0
      %p87 = por %p85, %p86
      %s88 = ssub.s32 %s22, %s29
      %p89 = scmp.eq.s32.totalorder %s88, 0
      %s91 = sadd.s32 %s90, 1
      %s92 = scalar_select %p89, %s90, %s91
      %p95 = pneg %p89
      %p96 = scmp.eq.s32.totalorder %s14, 3
      %p97 = por %p95, %p96
      %p98 = scmp.ne.s32.totalorder %s90, %s93
      %p99 = scmp.eq.s32.totalorder %s14, 0
      %p100 = por %p98, %p99
      %p101 = scmp.ne.s32.totalorder %s90, %s93
      %p102 = scmp.eq.s32.totalorder %s19, 3
      %p103 = por %p101, %p102
      %p104 = scmp.ne.s32.totalorder %s93, %s94
      %p105 = scmp.eq.s32.totalorder %s19, 0
      %p106 = por %p104, %p105
      %p107 = scmp.ne.s32.totalorder %s93, %s94
      %p108 = scmp.eq.s32.totalorder %s20, 3
      %p109 = por %p107, %p108
      %p111 = scmp.ne.s32.totalorder %s94, %s110
      %p112 = scmp.eq.s32.totalorder %s20, 0
      %p113 = por %p111, %p112
      %s115 = sadd.s32 %s114, 1
      %p118 = scmp.eq.s32.totalorder %s14, 3
      %p119 = scmp.ne.s32.totalorder %s114, %s116
      %p120 = scmp.eq.s32.totalorder %s14, 0
      %p121 = por %p119, %p120
      %p122 = scmp.ne.s32.totalorder %s114, %s116
      %p123 = scmp.eq.s32.totalorder %s19, 3
      %p124 = por %p122, %p123
      %p125 = scmp.ne.s32.totalorder %s116, %s117
      %p126 = scmp.eq.s32.totalorder %s19, 0
      %p127 = por %p125, %p126
      %p128 = scmp.ne.s32.totalorder %s116, %s117
      %p129 = scmp.eq.s32.totalorder %s20, 3
      %p130 = por %p128, %p129
      %p132 = scmp.ne.s32.totalorder %s117, %s131
      %p133 = scmp.eq.s32.totalorder %s20, 0
      %p134 = por %p132, %p133
      %s136 = sadd.s32 %s135, 1
      %p139 = scmp.eq.s32.totalorder %s14, 3
      %p140 = scmp.ne.s32.totalorder %s135, %s137
      %p141 = scmp.eq.s32.totalorder %s14, 0
      %p142 = por %p140, %p141
      %p143 = scmp.ne.s32.totalorder %s135, %s137
      %p144 = scmp.eq.s32.totalorder %s19, 3
      %p145 = por %p143, %p144
      %p146 = scmp.ne.s32.totalorder %s137, %s138
      %p147 = scmp.eq.s32.totalorder %s19, 0
      %p148 = por %p146, %p147
      %p149 = scmp.ne.s32.totalorder %s137, %s138
      %p150 = scmp.eq.s32.totalorder %s20, 3
      %p151 = por %p149, %p150
      %p153 = scmp.ne.s32.totalorder %s138, %s152
      %p154 = scmp.eq.s32.totalorder %s20, 0
      %p155 = por %p153, %p154
      %s156 = ssub.s32 %s21, %s33
      %p157 = scmp.eq.s32.totalorder %s156, 0
      %s159 = sadd.s32 %s158, 1
      %s160 = scalar_select %p157, %s158, %s159
      %p163 = pneg %p157
      %p164 = scmp.eq.s32.totalorder %s14, 3
      %p165 = por %p163, %p164
      %p166 = scmp.ne.s32.totalorder %s158, %s161
      %p167 = scmp.eq.s32.totalorder %s14, 0
      %p168 = por %p166, %p167
      %p169 = scmp.ne.s32.totalorder %s158, %s161
      %p170 = scmp.eq.s32.totalorder %s19, 3
      %p171 = por %p169, %p170
      %p172 = scmp.ne.s32.totalorder %s161, %s162
      %p173 = scmp.eq.s32.totalorder %s19, 0
      %p174 = por %p172, %p173
      %p175 = scmp.ne.s32.totalorder %s161, %s162
      %p176 = scmp.eq.s32.totalorder %s20, 3
      %p177 = por %p175, %p176
      %p179 = scmp.ne.s32.totalorder %s162, %s178
      %p180 = scmp.eq.s32.totalorder %s20, 0
      %p181 = por %p179, %p180
      %p182 = scmp.le.s32.totalorder 1, %s14
      %p183 = scmp.lt.s32.totalorder %s14, 5
      %p184 = pnand %p182, %p183
      %p185 = pneg %p184
      // Predicated region
      $region9: #{tpu_custom_call.1} parent=5 // pred_check
        _
      $region10: #{tpu_custom_call.1} parent=5 // pred_check_branch
        %187 = sbr.rel (%p184) target = $region12
      $region11: #{tpu_custom_call.1} parent=5 // pred_region
        %s188 = ssub.s32 %s14, 1
        // Predicated region
        $region13: #{tpu_custom_call.1} parent=11 // pred_check
          %p189 = pneg %p127
        $region14: #{tpu_custom_call.1} parent=11 // pred_check_branch
          %191 = sbr.rel (%p189) target = $region16
        $region15: #{tpu_custom_call.1} parent=11 // pred_region
          _
        $region16: #{tpu_custom_call.1} parent=11 // pred_fallthru
          _
        // Predicated region
        $region17: #{tpu_custom_call.1} parent=11 // pred_check
          %p192 = pneg %p148
        $region18: #{tpu_custom_call.1} parent=11 // pred_check_branch
          %194 = sbr.rel (%p192) target = $region20
        $region19: #{tpu_custom_call.1} parent=11 // pred_region
          _
        $region20: #{tpu_custom_call.1} parent=11 // pred_fallthru
          _
      $region12: #{tpu_custom_call.1} parent=5 // pred_fallthru
        _
      %p195 = scmp.lt.s32.totalorder %s14, 4
      // Predicated region
      $region21: #{tpu_custom_call.1} parent=5 // pred_check
        %p196 = pneg %p195
      $region22: #{tpu_custom_call.1} parent=5 // pred_check_branch
        %198 = sbr.rel (%p196) target = $region24
      $region23: #{tpu_custom_call.1} parent=5 // pred_region
        // Predicated region
        $region25: #{tpu_custom_call.1} parent=23 // pred_check
          %p199 = pneg %p46
        $region26: #{tpu_custom_call.1} parent=23 // pred_check_branch
          %201 = sbr.rel (%p199) target = $region28
        $region27: #{tpu_custom_call.1} parent=23 // pred_region
          %p202 = scmp.lt.s32.totalorder %s21, 1
          %s203 = scalar_select %p202, %s21, 1
          %s204 = smul.addr %s203, 4
          %s205 = scalar_lea.vmem %s0, %s204
        $region28: #{tpu_custom_call.1} parent=23 // pred_fallthru
          _
        // Predicated region
        $region29: #{tpu_custom_call.1} parent=23 // pred_check
          %p206 = pneg %p74
        $region30: #{tpu_custom_call.1} parent=23 // pred_check_branch
          %208 = sbr.rel (%p206) target = $region32
        $region31: #{tpu_custom_call.1} parent=23 // pred_region
          %p209 = scmp.lt.s32.totalorder %s21, 1
          %s210 = scalar_select %p209, %s21, 1
          %p211 = scmp.lt.s32.totalorder %s22, 1
          %s212 = scalar_select %p211, %s22, 1
          %s213 = smul.addr %s210, 2
          %s214 = sadd.s32 %s212, %s213
          %s215 = smul.addr %s214, 4
          %s216 = scalar_lea.vmem %s1, %s215
        $region32: #{tpu_custom_call.1} parent=23 // pred_fallthru
          _
        // Predicated region
        $region33: #{tpu_custom_call.1} parent=23 // pred_check
          %p217 = pneg %p100
        $region34: #{tpu_custom_call.1} parent=23 // pred_check_branch
          %219 = sbr.rel (%p217) target = $region36
        $region35: #{tpu_custom_call.1} parent=23 // pred_region
          %s220 = smul.u32 16, %s22
          %p221 = scmp.lt.s32.totalorder %s220, 31
          %s222 = scalar_select %p221, %s220, 31
          %s223 = smul.addr %s222, 4
          %s224 = scalar_lea.vmem %s2, %s223
          %s225 = smul.u32 16, %s22
        $region36: #{tpu_custom_call.1} parent=23 // pred_fallthru
          _
      $region24: #{tpu_custom_call.1} parent=5 // pred_fallthru
        _
      %p226 = scmp.le.s32.totalorder 1, %s14
      %p227 = scmp.lt.s32.totalorder %s14, 5
      %p228 = pnand %p226, %p227
      %p229 = pneg %p228
      // Predicated region
      $region37: #{tpu_custom_call.1} parent=5 // pred_check
        _
      $region38: #{tpu_custom_call.1} parent=5 // pred_check_branch
        %231 = sbr.rel (%p228) target = $region40
      $region39: #{tpu_custom_call.1} parent=5 // pred_region
        %s232 = ssub.s32 %s14, 1
        %p233 = scmp.lt.s32.totalorder %s23, 1
        %s234 = scalar_select %p233, %s23, 1
        %s235 = smul.addr %s234, 4
        %s236 = scalar_lea.vmem %s0, %s235
        %p237 = pneg %p52
        %p238 = pneg %p49
        %p239 = scmp.lt.s32.totalorder %s23, 1
        %s240 = scalar_select %p239, %s23, 1
        %p241 = scmp.lt.s32.totalorder %s24, 1
        %s242 = scalar_select %p241, %s24, 1
        %s243 = smul.addr %s240, 2
        %s244 = sadd.s32 %s242, %s243
        %s245 = smul.addr %s244, 4
        %s246 = scalar_lea.vmem %s1, %s245
        %p247 = pneg %p80
        %p248 = pneg %p77
        %s249 = smul.u32 16, %s24
        %p250 = scmp.lt.s32.totalorder %s249, 31
        %s251 = scalar_select %p250, %s249, 31
        %s252 = smul.addr %s251, 4
        %s253 = scalar_lea.vmem %s2, %s252
        %p254 = pneg %p106
        %p255 = pneg %p103
        %p256 = pneg %p127
        %p257 = pneg %p124
        %p258 = pneg %p148
        %p259 = pneg %p145
        %p260 = pneg %p174
        %p261 = pneg %p171
        %s262 = sand.u32 %s161, 1
        %s263 = scalar_lea.sflag [#allocation4], %s262
        %s264 = sand.u32 %s161, 1
        %s265 = smul.addr %s264, 8
        %s266 = scalar_lea.vmem [#allocation3], %s265
        %p267 = scmp.lt.s32.totalorder %s23, 1
        %s268 = scalar_select %p267, %s23, 1
        %s269 = smul.addr %s268, 4
        %s270 = scalar_lea.vmem %s0, %s269
        %p271 = scmp.lt.s32.totalorder %s23, 1
        %s272 = scalar_select %p271, %s23, 1
        %p273 = scmp.lt.s32.totalorder %s24, 1
        %s274 = scalar_select %p273, %s24, 1
        %s275 = smul.addr %s272, 2
        %s276 = sadd.s32 %s274, %s275
        %s277 = smul.addr %s276, 4
        %s278 = scalar_lea.vmem %s1, %s277
        %s279 = smul.u32 16, %s24
        %p280 = scmp.lt.s32.totalorder %s279, 31
        %s281 = scalar_select %p280, %s279, 31
        %s282 = smul.addr %s281, 4
        %s283 = scalar_lea.vmem %s2, %s282
        %s284 = smul.u32 16, %s24
        %p286 = scmp.eq.s32.totalorder %s24, 0
        // Predicated region
        $region41: #{tpu_custom_call.1} parent=39 // pred_check
          %p287 = pneg %p286
        $region42: #{tpu_custom_call.1} parent=39 // pred_check_branch
          %289 = sbr.rel (%p287) target = $region44
        $region43: #{tpu_custom_call.1} parent=39 // pred_region
          %vm290 = vcmask 261120
          %291 = vst.msk [vmem:[#allocation2] sm:$0xff] %vm290, 0.0
        $region44: #{tpu_custom_call.1} parent=39 // pred_fallthru
          _
        %v292 = vld [vmem:[#allocation2] sm:$0xff]
        %v293 = vld [vmem:[%s278] sm:$0xf]
        %v294 = vld [vmem:[%s283] sm:$0xf]
        %v295 = vld [vmem:[%s283 + $0x4] sm:$0xf]
        %v296 = vld [vmem:[%s283 + $0x8] sm:$0xf]
        %v297 = vld [vmem:[%s283 + $0xc] sm:$0xf]
        %v298 = vld [vmem:[%s283 + $0x10] sm:$0xf]
        %v299 = vld [vmem:[%s283 + $0x14] sm:$0xf]
        %v300 = vld [vmem:[%s283 + $0x18] sm:$0xf]
        %v301 = vld [vmem:[%s283 + $0x1c] sm:$0xf]
        %v302 = vld [vmem:[%s283 + $0x20] sm:$0xf]
        %v303 = vld [vmem:[%s283 + $0x24] sm:$0xf]
        %v304 = vld [vmem:[%s283 + $0x28] sm:$0xf]
        %v305 = vld [vmem:[%s283 + $0x2c] sm:$0xf]
        %v306 = vld [vmem:[%s283 + $0x30] sm:$0xf]
        %v307 = vld [vmem:[%s283 + $0x34] sm:$0xf]
        %v308 = vld [vmem:[%s283 + $0x38] sm:$0xf]
        %v309 = vld [vmem:[%s283 + $0x3c] sm:$0xf]
        %v326 = vunpack.c.l.b16 %v294
        %v327 = vunpack.c.l.b16 %v295
        %v328 = vunpack.c.l.b16 %v296
        %v329 = vunpack.c.l.b16 %v297
        %v330 = vunpack.c.l.b16 %v298
        %v331 = vunpack.c.l.b16 %v299
        %v332 = vunpack.c.l.b16 %v300
        %v333 = vunpack.c.l.b16 %v301
        %v334 = vunpack.c.l.b16 %v302
        %v335 = vunpack.c.l.b16 %v303
        %v336 = vunpack.c.l.b16 %v304
        %v337 = vunpack.c.l.b16 %v305
        %v338 = vunpack.c.l.b16 %v306
        %v339 = vunpack.c.l.b16 %v307
        %v340 = vunpack.c.l.b16 %v308
        %v341 = vunpack.c.l.b16 %v309
        %v342 = vpack.c.b16 %v327, %v326
        %v343 = vpack.c.b16 %v329, %v328
        %v344 = vpack.c.b16 %v331, %v330
        %v345 = vpack.c.b16 %v333, %v332
        %v346 = vpack.c.b16 %v335, %v334
        %v347 = vpack.c.b16 %v337, %v336
        %v348 = vpack.c.b16 %v339, %v338
        %v349 = vpack.c.b16 %v341, %v340
        %358 = vmatprep.subr.bf16.mxu0 0
        %359 = vmatpush1.bf16.msra.mxu0 %v342
        %360 = vmatprep.subr.bf16.mxu0 0
        %361 = vmatpush1.bf16.msra.mxu0 %v343
        %362 = vmatprep.subr.bf16.mxu0 0
        %363 = vmatpush1.bf16.msra.mxu0 %v344
        %364 = vmatprep.subr.bf16.mxu0 0
        %365 = vmatpush1.bf16.msra.mxu0 %v345
        %366 = vmatprep.subr.bf16.mxu0 0
        %367 = vmatpush1.bf16.msra.mxu0 %v346
        %368 = vmatprep.subr.bf16.mxu0 0
        %369 = vmatpush1.bf16.msra.mxu0 %v347
        %370 = vmatprep.subr.bf16.mxu0 0
        %371 = vmatpush1.bf16.msra.mxu0 %v348
        %372 = vmatprep.subr.bf16.mxu0 0
        %373 = vmatpush1.bf16.msra.mxu0 %v349
        %374 = vmatprep.subr.bf16.mxu0 0
        %375 = vmatpush1.bf16.msra.mxu0 0
        %376 = vmatprep.subr.bf16.mxu0 0
        %377 = vmatpush1.bf16.msra.mxu0 0
        %378 = vmatprep.subr.bf16.mxu0 0
        %379 = vmatpush1.bf16.msra.mxu0 0
        %380 = vmatprep.subr.bf16.mxu0 0
        %381 = vmatpush1.bf16.msra.mxu0 0
        %382 = vmatprep.subr.bf16.mxu0 0
        %383 = vmatpush1.bf16.msra.mxu0 0
        %384 = vmatprep.subr.bf16.mxu0 0
        %385 = vmatpush1.bf16.msra.mxu0 0
        %386 = vmatprep.subr.bf16.mxu0 0
        %387 = vmatpush1.bf16.msra.mxu0 0
        %388 = vmatprep.subr.bf16.mxu0 0
        %389 = vmatpush1.bf16.msra.mxu0 0
        %390 = vmatprep.mubr.bf16.mxu0 0
        %391 = vmatmul.mubr.bf16.gmra.mrb[0].mxu0 %v293
        %v392 = vpop.f32.mrb[0].mxu0
        %v393 = vadd.f32 0.0, %v392
        %v394 = vpop.f32.mrb[0].mxu0
        %v395 = vpop.f32.mrb[0].mxu0
        %v396 = vpop.f32.mrb[0].mxu0
        %397 = vdwg.mxu0
        %v398 = vadd.f32 %v292, %v393
        %vm399 = vcmask 261120
        %400 = vst.msk [vmem:[#allocation2] sm:$0xff] %vm399, %v398
        %p401 = scmp.eq.s32.totalorder %s24, 1
        // Predicated region
        $region45: #{tpu_custom_call.1} parent=39 // pred_check
          %p402 = pneg %p401
        $region46: #{tpu_custom_call.1} parent=39 // pred_check_branch
          %404 = sbr.rel (%p402) target = $region48
        $region47: #{tpu_custom_call.1} parent=39 // pred_region
          %v405 = vld [vmem:[%s270] sm:$0xf]
          %v406 = vld [vmem:[#allocation2] sm:$0xff]
          %v407 = vpack.c.bf16 %v406, %v406
          %409 = vrot.lane.b32.xlu0 %v407, 32
          %v410 = vpop.permute.xlu0 %409
          %v413 = vsel %vm399, %v405, %v410
          %v414 = vld [vmem:[%s3] sm:$0xf]
          %v415 = vld [vmem:[%s3 + $0x4] sm:$0xf]
          %v416 = vld [vmem:[%s3 + $0x8] sm:$0xf]
          %v417 = vld [vmem:[%s3 + $0xc] sm:$0xf]
          %v418 = vld [vmem:[%s3 + $0x10] sm:$0xf]
          %v419 = vld [vmem:[%s3 + $0x14] sm:$0xf]
          %v420 = vld [vmem:[%s3 + $0x18] sm:$0xf]
          %v421 = vld [vmem:[%s3 + $0x1c] sm:$0xf]
          %v430 = vunpack.c.l.b16 %v414
          %v431 = vunpack.c.l.b16 %v415
          %v432 = vunpack.c.l.b16 %v416
          %v433 = vunpack.c.l.b16 %v417
          %v434 = vunpack.c.l.b16 %v418
          %v435 = vunpack.c.l.b16 %v419
          %v436 = vunpack.c.l.b16 %v420
          %v437 = vunpack.c.l.b16 %v421
          %v438 = vpack.c.b16 %v431, %v430
          %v439 = vpack.c.b16 %v433, %v432
          %v440 = vpack.c.b16 %v435, %v434
          %v441 = vpack.c.b16 %v437, %v436
          %vm446 = vcmask 523264
          %v447 = vsel %vm446, %v413, 0
          %449 = vmatprep.subr.bf16.mxu0 0
          %450 = vmatpush1.bf16.msra.mxu0 %v438
          %451 = vmatprep.subr.bf16.mxu0 0
          %452 = vmatpush1.bf16.msra.mxu0 %v439
          %453 = vmatprep.subr.bf16.mxu0 0
          %454 = vmatpush1.bf16.msra.mxu0 %v440
          %455 = vmatprep.subr.bf16.mxu0 0
          %456 = vmatpush1.bf16.msra.mxu0 %v441
          %457 = vmatprep.subr.bf16.mxu0 0
          %458 = vmatpush1.bf16.msra.mxu0 0
          %459 = vmatprep.subr.bf16.mxu0 0
          %460 = vmatpush1.bf16.msra.mxu0 0
          %461 = vmatprep.subr.bf16.mxu0 0
          %462 = vmatpush1.bf16.msra.mxu0 0
          %463 = vmatprep.subr.bf16.mxu0 0
          %464 = vmatpush1.bf16.msra.mxu0 0
          %465 = vmatprep.subr.bf16.mxu0 0
          %466 = vmatpush1.bf16.msra.mxu0 0
          %467 = vmatprep.subr.bf16.mxu0 0
          %468 = vmatpush1.bf16.msra.mxu0 0
          %469 = vmatprep.subr.bf16.mxu0 0
          %470 = vmatpush1.bf16.msra.mxu0 0
          %471 = vmatprep.subr.bf16.mxu0 0
          %472 = vmatpush1.bf16.msra.mxu0 0
          %473 = vmatprep.subr.bf16.mxu0 0
          %474 = vmatpush1.bf16.msra.mxu0 0
          %475 = vmatprep.subr.bf16.mxu0 0
          %476 = vmatpush1.bf16.msra.mxu0 0
          %477 = vmatprep.subr.bf16.mxu0 0
          %478 = vmatpush1.bf16.msra.mxu0 0
          %479 = vmatprep.subr.bf16.mxu0 0
          %480 = vmatpush1.bf16.msra.mxu0 0
          %481 = vmatprep.mubr.bf16.mxu0 0
          %482 = vmatmul.mubr.bf16.gmra.mrb[0].mxu0 %v447
          %v483 = vpop.f32.mrb[0].mxu0
          %v484 = vadd.f32 0.0, %v483
          %v485 = vpop.f32.mrb[0].mxu0
          %v486 = vpop.f32.mrb[0].mxu0
          %v487 = vpop.f32.mrb[0].mxu0
          %488 = vdwg.mxu0
          %v489 = vmax.f32 %v484, 0.0
          %v490 = vpack.c.bf16 %v489, %v489
          %v491 = vld [vmem:[%s4] sm:$0xf]
          %v492 = vld [vmem:[%s4 + $0x4] sm:$0xf]
          %v493 = vld [vmem:[%s4 + $0x8] sm:$0xf]
          %v494 = vld [vmem:[%s4 + $0xc] sm:$0xf]
          %v495 = vld [vmem:[%s4 + $0x10] sm:$0xf]
          %v496 = vld [vmem:[%s4 + $0x14] sm:$0xf]
          %v497 = vld [vmem:[%s4 + $0x18] sm:$0xf]
          %v498 = vld [vmem:[%s4 + $0x1c] sm:$0xf]
          %v507 = vunpack.c.l.b16 %v491
          %v508 = vunpack.c.l.b16 %v492
          %v509 = vunpack.c.l.b16 %v493
          %v510 = vunpack.c.l.b16 %v494
          %v511 = vunpack.c.l.b16 %v495
          %v512 = vunpack.c.l.b16 %v496
          %v513 = vunpack.c.l.b16 %v497
          %v514 = vunpack.c.l.b16 %v498
          %v515 = vpack.c.b16 %v508, %v507
          %v516 = vpack.c.b16 %v510, %v509
          %v517 = vpack.c.b16 %v512, %v511
          %v518 = vpack.c.b16 %v514, %v513
          %v524 = vsel %vm446, %v490, 0
          %526 = vmatprep.subr.bf16.mxu0 0
          %527 = vmatpush1.bf16.msra.mxu0 %v515
          %528 = vmatprep.subr.bf16.mxu0 0
          %529 = vmatpush1.bf16.msra.mxu0 %v516
          %530 = vmatprep.subr.bf16.mxu0 0
          %531 = vmatpush1.bf16.msra.mxu0 %v517
          %532 = vmatprep.subr.bf16.mxu0 0
          %533 = vmatpush1.bf16.msra.mxu0 %v518
          %534 = vmatprep.subr.bf16.mxu0 0
          %535 = vmatpush1.bf16.msra.mxu0 0
          %536 = vmatprep.subr.bf16.mxu0 0
          %537 = vmatpush1.bf16.msra.mxu0 0
          %538 = vmatprep.subr.bf16.mxu0 0
          %539 = vmatpush1.bf16.msra.mxu0 0
          %540 = vmatprep.subr.bf16.mxu0 0
          %541 = vmatpush1.bf16.msra.mxu0 0
          %542 = vmatprep.subr.bf16.mxu0 0
          %543 = vmatpush1.bf16.msra.mxu0 0
          %544 = vmatprep.subr.bf16.mxu0 0
          %545 = vmatpush1.bf16.msra.mxu0 0
          %546 = vmatprep.subr.bf16.mxu0 0
          %547 = vmatpush1.bf16.msra.mxu0 0
          %548 = vmatprep.subr.bf16.mxu0 0
          %549 = vmatpush1.bf16.msra.mxu0 0
          %550 = vmatprep.subr.bf16.mxu0 0
          %551 = vmatpush1.bf16.msra.mxu0 0
          %552 = vmatprep.subr.bf16.mxu0 0
          %553 = vmatpush1.bf16.msra.mxu0 0
          %554 = vmatprep.subr.bf16.mxu0 0
          %555 = vmatpush1.bf16.msra.mxu0 0
          %556 = vmatprep.subr.bf16.mxu0 0
          %557 = vmatpush1.bf16.msra.mxu0 0
          %558 = vmatprep.mubr.bf16.mxu0 0
          %559 = vmatmul.mubr.bf16.gmra.mrb[0].mxu0 %v524
          %v560 = vpop.f32.mrb[0].mxu0
          %v561 = vadd.f32 0.0, %v560
          %v562 = vpop.f32.mrb[0].mxu0
          %v563 = vpop.f32.mrb[0].mxu0
          %v564 = vpop.f32.mrb[0].mxu0
          %565 = vdwg.mxu0
          %566 = vst [vmem:[%s266] sm:$0xff] %v561
        $region48: #{tpu_custom_call.1} parent=39 // pred_fallthru
          _
        %s567 = sand.u32 %s161, 1
        %s568 = scalar_lea.sflag [#allocation4], %s567
        %s569 = sand.u32 %s161, 1
        %s570 = smul.addr %s569, 8
        %s571 = scalar_lea.vmem [#allocation3], %s570
        // Predicated region
        $region49: #{tpu_custom_call.1} parent=39 // pred_check
          %p572 = pneg %p171
        $region50: #{tpu_custom_call.1} parent=39 // pred_check_branch
          %574 = sbr.rel (%p572) target = $region52
        $region51: #{tpu_custom_call.1} parent=39 // pred_region
          %s576 = ssub.s32 128, 128
          %577 = vsyncadd %s568, %s576
          %s578 = smul.addr %s23, 128
          %s579 = scalar_lea.hbm %s5, %s578
          %s581 = sshll.u32 %s571, 4
          %s582 = int_to_ptr.vmem [resolvable:$true] %s581
          %584 = dma.vmem_to_hbm [thread:$0]  %s582, 128, %s579, %s568
        $region52: #{tpu_custom_call.1} parent=39 // pred_fallthru
          _
      $region40: #{tpu_custom_call.1} parent=5 // pred_fallthru
        _
      %p585 = scmp.le.s32.totalorder 2, %s14
      // Predicated region
      $region53: #{tpu_custom_call.1} parent=5 // pred_check
        %p586 = pneg %p585
      $region54: #{tpu_custom_call.1} parent=5 // pred_check_branch
        %588 = sbr.rel (%p586) target = $region56
      $region55: #{tpu_custom_call.1} parent=5 // pred_region
        %s589 = ssub.s32 %s14, 2
        // Predicated region
        $region57: #{tpu_custom_call.1} parent=55 // pred_check
          %p590 = pneg %p177
        $region58: #{tpu_custom_call.1} parent=55 // pred_check_branch
          %592 = sbr.rel (%p590) target = $region60
        $region59: #{tpu_custom_call.1} parent=55 // pred_region
          %s593 = sand.u32 %s162, 1
          %s594 = scalar_lea.sflag [#allocation4], %s593
          %s595 = sand.u32 %s162, 1
          %s596 = smul.addr %s595, 8
          %s597 = scalar_lea.vmem [#allocation3], %s596
          %598 = dma.done %s594, 128
        $region60: #{tpu_custom_call.1} parent=55 // pred_fallthru
          _
      $region56: #{tpu_custom_call.1} parent=5 // pred_fallthru
        _
    $region6: #{tpu_custom_call.1} parent=1 // loop_footer
      %s18 = sadd.s32 1, %s14
    $region7: #{tpu_custom_call.1} parent=1 // loop_footer_branch
      %13 = sbr.rel target = $region3
    $region8: #{tpu_custom_call.1} parent=1 // loop_exit
      _
    %599 = vsyncpa [#allocation4], 1
    %s600 = scalar_lea.sflag [#allocation4], 1
    %601 = vsyncpa %s600, 1

</llo_original>
